<compile_context>
chip_gen: v5e
topology: v5e:2x2
jax: 0.10.0
libtpu: 0.0.40
codegen_flags: <defaults>
</compile_context>

<pallas_src>
import jax
import jax.numpy as jnp
from jax.experimental import pallas as pl
from jax.experimental.pallas import tpu as pltpu


def _mlp_kernel(x_ref, w1_ref, b1_ref, w2_ref, b2_ref, w3_ref, b3_ref, o_ref):
    """Fused hot path: two (Linear + ReLU) layers and a final Linear, all in VMEM.

    x / w* are bf16; accumulation is f32 (preferred_element_type); biases f32.
    Bias-add + ReLU are VPU filler under the MXU dots (effectively free).
    """
    x = x_ref[...]                                                        # [TB, D_in] bf16

    h1 = jnp.dot(x, w1_ref[...], preferred_element_type=jnp.float32)     # [TB, H1] f32
    h1 = jnp.maximum(h1 + b1_ref[...], 0.0)                              # ReLU

    h2 = jnp.dot(h1.astype(jnp.bfloat16), w2_ref[...],
                 preferred_element_type=jnp.float32)                     # [TB, H2] f32
    h2 = jnp.maximum(h2 + b2_ref[...], 0.0)                              # ReLU

    out = jnp.dot(h2.astype(jnp.bfloat16), w3_ref[...],
                  preferred_element_type=jnp.float32)                    # [TB, D_out] f32
    o_ref[...] = (out + b3_ref[...]).astype(o_ref.dtype)


def _round_up(n, m):
    return ((n + m - 1) // m) * m


def fully_connected_forward(x, params, *, block_batch=512):
    """Run the fused MLP kernel.

    x:      [batch, input_dim]  float32
    params: dict with w1 [D_in,H1], b1 [1,H1], w2 [H1,H2], b2 [1,H2],
            w3 [H2,D_out], b3 [1,D_out]   (all float32)

    block_batch: batch-tile upper bound; sweep per generation (v7x has 64 MiB
    VMEM vs 128 MiB on v5e/v6e, so keep TB modest there).  512 is safe on all.
    """
    batch, d_in = x.shape
    h1 = params["w1"].shape[1]
    h2 = params["w2"].shape[1]
    d_out = params["w3"].shape[1]

    # Batch tile: multiple of 8 (sublane), and padded batch divisible by it.
    tb = max(8, min(block_batch, _round_up(batch, 8)))
    padded = pl.cdiv(batch, tb) * tb
    x_p = x if padded == batch else jnp.pad(x, ((0, padded - batch), (0, 0)))

    # bf16 operands for native-rate MXU matmuls (f32 accumulation in-kernel).
    x_bf = x_p.astype(jnp.bfloat16)
    w1 = params["w1"].astype(jnp.bfloat16)
    w2 = params["w2"].astype(jnp.bfloat16)
    w3 = params["w3"].astype(jnp.bfloat16)
    b1, b2, b3 = params["b1"], params["b2"], params["b3"]

    # Weights/biases: full-array blocks, constant index_map -> VMEM-resident.
    def const_spec(a):
        return pl.BlockSpec(a.shape, lambda i, _nd=a.ndim: (0,) * _nd)

    flops = 2 * padded * (d_in * h1 + h1 * h2 + h2 * d_out)
    bytes_accessed = (
        x_bf.size * 2 + padded * d_out * 4
        + (w1.size + w2.size + w3.size) * 2
        + (b1.size + b2.size + b3.size) * 4
    )

    out = pl.pallas_call(
        _mlp_kernel,
        out_shape=jax.ShapeDtypeStruct((padded, d_out), jnp.float32),
        grid=(padded // tb,),
        in_specs=[
            pl.BlockSpec((tb, d_in), lambda i: (i, 0)),   # x: walks batch tiles
            const_spec(w1), const_spec(b1),
            const_spec(w2), const_spec(b2),
            const_spec(w3), const_spec(b3),
        ],
        out_specs=pl.BlockSpec((tb, d_out), lambda i: (i, 0)),
        compiler_params=pltpu.CompilerParams(
            # Batch tiles are independent -> shard across TCs on v7x megacore.
            dimension_semantics=("parallel",),
        ),
        cost_estimate=pl.CostEstimate(
            flops=flops, transcendentals=0, bytes_accessed=bytes_accessed),
    )(x_bf, w1, b1, w2, b2, w3, b3)

    return out[:batch]


def init_params(key, input_dim, hidden_dims, output_dim):
    """Deterministic init matching the nn.Linear shapes of the module."""
    dims = [input_dim] + list(hidden_dims) + [output_dim]
    params = {}
    for i, (d_in, d_out) in enumerate(zip(dims[:-1], dims[1:]), start=1):
        key, kw, kb = jax.random.split(key, 3)
        bound = 1.0 / jnp.sqrt(jnp.float32(d_in))  # same scale as torch default init
        params[f"w{i}"] = jax.random.uniform(kw, (d_in, d_out), jnp.float32, -bound, bound)
        params[f"b{i}"] = jax.random.uniform(kb, (1, d_out), jnp.float32, -bound, bound)
    return params


def reference_forward(x, params):
    """Plain-JAX f32 reference for correctness checking."""
    h = jnp.maximum(x @ params["w1"] + params["b1"], 0.0)
    h = jnp.maximum(h @ params["w2"] + params["b2"], 0.0)
    return h @ params["w3"] + params["b3"]


if __name__ == "__main__":
    key = jax.random.PRNGKey(0)

    input_dim = 16
    hidden_dims = [64, 32]   # module default
    output_dim = 1

    key, kp = jax.random.split(key)
    params = init_params(kp, input_dim, hidden_dims, output_dim)

    # bf16 operands -> loosen tolerance vs the f32 reference.
    ATOL = RTOL = 5e-2

    # Case 1: small batch, exactly tile-aligned.
    key, kx = jax.random.split(key)
    x = jax.random.normal(kx, (8, input_dim), jnp.float32)
    out = jax.block_until_ready(fully_connected_forward(x, params))
    ref = reference_forward(x, params)
    assert out.shape == (8, output_dim), out.shape
    assert jnp.allclose(out, ref, atol=ATOL, rtol=RTOL), "mismatch vs reference (batch=8)"

    # Case 2: batch not a multiple of the tile -> exercises the padding path.
    key, kx = jax.random.split(key)
    x2 = jax.random.normal(kx, (37, input_dim), jnp.float32)
    out2 = jax.block_until_ready(fully_connected_forward(x2, params))
    ref2 = reference_forward(x2, params)
    assert out2.shape == (37, output_dim), out2.shape
    assert jnp.allclose(out2, ref2, atol=ATOL, rtol=RTOL), "mismatch vs reference (batch=37)"

    print("KERNEL_OK")
</pallas_src>

<mosaic_0001>
module attributes {stable_mosaic.version = 11 : i64} {
  func.func @_mlp_kernel(%arg0: i32, %arg1: memref<8x16xbf16, #tpu.memory_space<vmem>>, %arg2: memref<16x64xbf16, #tpu.memory_space<vmem>>, %arg3: memref<1x64xf32, #tpu.memory_space<vmem>>, %arg4: memref<64x32xbf16, #tpu.memory_space<vmem>>, %arg5: memref<1x32xf32, #tpu.memory_space<vmem>>, %arg6: memref<32x1xbf16, #tpu.memory_space<vmem>>, %arg7: memref<1x1xf32, #tpu.memory_space<vmem>>, %arg8: memref<8x1xf32, #tpu.memory_space<vmem>>) attributes {dimension_semantics = [#tpu.dimension_semantics<parallel>], iteration_bounds = array<i64: 1>, scalar_prefetch = 0 : i64, scratch_operands = 0 : i64, tpu.core_type = #tpu.core_type<tc>, window_params = [{transform_indices = @transform_0, window_bounds = array<i64: 8, 16>}, {pipeline_mode = #tpu.pipeline_mode<synchronous>, transform_indices = @transform_1, window_bounds = array<i64: 16, 64>}, {pipeline_mode = #tpu.pipeline_mode<synchronous>, transform_indices = @transform_2, window_bounds = array<i64: 1, 64>}, {pipeline_mode = #tpu.pipeline_mode<synchronous>, transform_indices = @transform_3, window_bounds = array<i64: 64, 32>}, {pipeline_mode = #tpu.pipeline_mode<synchronous>, transform_indices = @transform_4, window_bounds = array<i64: 1, 32>}, {pipeline_mode = #tpu.pipeline_mode<synchronous>, transform_indices = @transform_5, window_bounds = array<i64: 32, 1>}, {pipeline_mode = #tpu.pipeline_mode<synchronous>, transform_indices = @transform_6, window_bounds = array<i64: 1, 1>}, {transform_indices = @transform_7, window_bounds = array<i64: 8, 1>}]} {
    %c0 = arith.constant 0 : index
    %c0_0 = arith.constant 0 : index
    %0 = vector.load %arg1[%c0, %c0_0] : memref<8x16xbf16, #tpu.memory_space<vmem>>, vector<8x16xbf16>
    %c0_1 = arith.constant 0 : index
    %c0_2 = arith.constant 0 : index
    %1 = vector.load %arg2[%c0_1, %c0_2] : memref<16x64xbf16, #tpu.memory_space<vmem>>, vector<16x64xbf16>
    %cst = arith.constant dense<0.000000e+00> : vector<8x64xf32>
    %2 = tpu.matmul %0, %1, %cst {dimension_numbers = #tpu.dot_dimension_numbers<[1], [0], [0], [1], [0, 0, 1, 1], [], []>} : vector<8x16xbf16>, vector<16x64xbf16>, vector<8x64xf32> -> vector<8x64xf32>
    %c0_3 = arith.constant 0 : index
    %c0_4 = arith.constant 0 : index
    %3 = vector.load %arg3[%c0_3, %c0_4] : memref<1x64xf32, #tpu.memory_space<vmem>>, vector<1x64xf32>
    %4 = vector.broadcast %3 : vector<1x64xf32> to vector<8x64xf32>
    %5 = arith.addf %2, %4 : vector<8x64xf32>
    %cst_5 = arith.constant 0.000000e+00 : f32
    %6 = vector.broadcast %cst_5 : f32 to vector<8x64xf32>
    %7 = arith.maximumf %5, %6 : vector<8x64xf32>
    %8 = arith.truncf %7 : vector<8x64xf32> to vector<8x64xbf16>
    %c0_6 = arith.constant 0 : index
    %c0_7 = arith.constant 0 : index
    %9 = vector.load %arg4[%c0_6, %c0_7] : memref<64x32xbf16, #tpu.memory_space<vmem>>, vector<64x32xbf16>
    %cst_8 = arith.constant dense<0.000000e+00> : vector<8x32xf32>
    %10 = tpu.matmul %8, %9, %cst_8 {dimension_numbers = #tpu.dot_dimension_numbers<[1], [0], [0], [1], [0, 0, 1, 1], [], []>} : vector<8x64xbf16>, vector<64x32xbf16>, vector<8x32xf32> -> vector<8x32xf32>
    %c0_9 = arith.constant 0 : index
    %c0_10 = arith.constant 0 : index
    %11 = vector.load %arg5[%c0_9, %c0_10] : memref<1x32xf32, #tpu.memory_space<vmem>>, vector<1x32xf32>
    %12 = vector.broadcast %11 : vector<1x32xf32> to vector<8x32xf32>
    %13 = arith.addf %10, %12 : vector<8x32xf32>
    %cst_11 = arith.constant 0.000000e+00 : f32
    %14 = vector.broadcast %cst_11 : f32 to vector<8x32xf32>
    %15 = arith.maximumf %13, %14 : vector<8x32xf32>
    %16 = arith.truncf %15 : vector<8x32xf32> to vector<8x32xbf16>
    %c0_12 = arith.constant 0 : index
    %c0_13 = arith.constant 0 : index
    %17 = vector.load %arg6[%c0_12, %c0_13] : memref<32x1xbf16, #tpu.memory_space<vmem>>, vector<32x1xbf16>
    %cst_14 = arith.constant dense<0.000000e+00> : vector<8x1xf32>
    %18 = tpu.matmul %16, %17, %cst_14 {dimension_numbers = #tpu.dot_dimension_numbers<[1], [0], [0], [1], [0, 0, 1, 1], [], []>} : vector<8x32xbf16>, vector<32x1xbf16>, vector<8x1xf32> -> vector<8x1xf32>
    %c0_15 = arith.constant 0 : index
    %c0_16 = arith.constant 0 : index
    %19 = vector.load %arg7[%c0_15, %c0_16] : memref<1x1xf32, #tpu.memory_space<vmem>>, vector<1x1xf32>
    %20 = vector.broadcast %19 : vector<1x1xf32> to vector<8x1xf32>
    %21 = arith.addf %18, %20 : vector<8x1xf32>
    %c0_17 = arith.constant 0 : index
    %c0_18 = arith.constant 0 : index
    %22 = vector.load %arg8[%c0_17, %c0_18] : memref<8x1xf32, #tpu.memory_space<vmem>>, vector<8x1xf32>
    tpu.vector_store %arg8[%c0_17, %c0_18], %21 {strides = array<i32>} : memref<8x1xf32, #tpu.memory_space<vmem>>, vector<8x1xf32>,
    return
  }
  func.func @transform_0(%arg0: i32) -> (i32, i32) {
    %c0_i32 = arith.constant 0 : i32
    %c0_i32_0 = arith.constant 0 : i32
    return %arg0, %c0_i32 : i32, i32
  }
  func.func @transform_1(%arg0: i32) -> (i32, i32) {
    %c0_i32 = arith.constant 0 : i32
    %c0_i32_0 = arith.constant 0 : i32
    %c0_i32_1 = arith.constant 0 : i32
    return %c0_i32, %c0_i32_0 : i32, i32
  }
  func.func @transform_2(%arg0: i32) -> (i32, i32) {
    %c0_i32 = arith.constant 0 : i32
    %c0_i32_0 = arith.constant 0 : i32
    %c0_i32_1 = arith.constant 0 : i32
    return %c0_i32, %c0_i32_0 : i32, i32
  }
  func.func @transform_3(%arg0: i32) -> (i32, i32) {
    %c0_i32 = arith.constant 0 : i32
    %c0_i32_0 = arith.constant 0 : i32
    %c0_i32_1 = arith.constant 0 : i32
    return %c0_i32, %c0_i32_0 : i32, i32
  }
  func.func @transform_4(%arg0: i32) -> (i32, i32) {
    %c0_i32 = arith.constant 0 : i32
    %c0_i32_0 = arith.constant 0 : i32
    %c0_i32_1 = arith.constant 0 : i32
    return %c0_i32, %c0_i32_0 : i32, i32
  }
  func.func @transform_5(%arg0: i32) -> (i32, i32) {
    %c0_i32 = arith.constant 0 : i32
    %c0_i32_0 = arith.constant 0 : i32
    %c0_i32_1 = arith.constant 0 : i32
    return %c0_i32, %c0_i32_0 : i32, i32
  }
  func.func @transform_6(%arg0: i32) -> (i32, i32) {
    %c0_i32 = arith.constant 0 : i32
    %c0_i32_0 = arith.constant 0 : i32
    %c0_i32_1 = arith.constant 0 : i32
    return %c0_i32, %c0_i32_0 : i32, i32
  }
  func.func @transform_7(%arg0: i32) -> (i32, i32) {
    %c0_i32 = arith.constant 0 : i32
    %c0_i32_0 = arith.constant 0 : i32
    return %arg0, %c0_i32 : i32, i32
  }
}

</mosaic_0001>

<llo_original>
// kernel: tpu_custom_call.1
$region0: #{tpu_custom_call.1}
  #allocation0 [shape = 'u32[]', space=smem, size = 0x4, offset = 0x4, fixed_abs, tag = 'smem constant byte address 0x4 - core index']
  #allocation1 [shape = 'u32[72,128]{1,0:T(1,128)}', space=vmem, size = 0x9000, scoped, tag = 'internal scratch']
  #allocation2 [shape = 'f32[1,1]{1,0:T(1,128)S(1)}', space=vmem, size = 0x200, scoped, tag = 'scoped memory for tpu_custom_call.1']
  %s0 = inlined_call_operand.vmem [shape: bf16[8,16], index: 0, kind: input, shape index: {}]
  %s1 = inlined_call_operand.vmem [shape: bf16[16,64], index: 1, kind: input, shape index: {}]
  %s2 = inlined_call_operand.vmem [shape: f32[1,64], index: 2, kind: input, shape index: {}]
  %s3 = inlined_call_operand.vmem [shape: bf16[64,32], index: 3, kind: input, shape index: {}]
  %s4 = inlined_call_operand.vmem [shape: f32[1,32], index: 4, kind: input, shape index: {}]
  %s5 = inlined_call_operand.vmem [shape: bf16[32,1], index: 5, kind: input, shape index: {}]
  %s6 = inlined_call_operand.<no memory space> [shape: f32[1,1], index: 6, kind: input, shape index: {}]
  %s7 = inlined_call_operand.vmem [shape: f32[8,1], index: 7, kind: output, shape index: {}]
  %s8 = sld [smem:[#allocation0]]
  $region38: #{tpu_custom_call.1} parent=0
    _
  %s10 = ssub.s32 1, %s8
  %s11 = scalar_select 0, %s10, %s8
  %v12 = vstv %s6
  %13 = vst [vmem:[#allocation2] sm:$0x1] %v12
  // Predicated region
  $region2: #{tpu_custom_call.1} parent=0 // pred_check
    _
  $region3: #{tpu_custom_call.1} parent=0 // pred_check_branch
    %15 = sbr.rel (0) target = $region5
  $region4: #{tpu_custom_call.1} parent=0 // pred_region
    _
  $region5: #{tpu_custom_call.1} parent=0 // pred_fallthru
    _
  // Predicated region
  $region6: #{tpu_custom_call.1} parent=0 // pred_check
    _
  $region7: #{tpu_custom_call.1} parent=0 // pred_check_branch
    %17 = sbr.rel (0) target = $region9
  $region8: #{tpu_custom_call.1} parent=0 // pred_region
    _
  $region9: #{tpu_custom_call.1} parent=0 // pred_fallthru
    _
  // Predicated region
  $region10: #{tpu_custom_call.1} parent=0 // pred_check
    _
  $region11: #{tpu_custom_call.1} parent=0 // pred_check_branch
    %19 = sbr.rel (0) target = $region13
  $region12: #{tpu_custom_call.1} parent=0 // pred_region
    _
  $region13: #{tpu_custom_call.1} parent=0 // pred_fallthru
    _
  // Predicated region
  $region14: #{tpu_custom_call.1} parent=0 // pred_check
    _
  $region15: #{tpu_custom_call.1} parent=0 // pred_check_branch
    %21 = sbr.rel (0) target = $region17
  $region16: #{tpu_custom_call.1} parent=0 // pred_region
    _
  $region17: #{tpu_custom_call.1} parent=0 // pred_fallthru
    _
  // Predicated region
  $region18: #{tpu_custom_call.1} parent=0 // pred_check
    _
  $region19: #{tpu_custom_call.1} parent=0 // pred_check_branch
    %23 = sbr.rel (0) target = $region21
  $region20: #{tpu_custom_call.1} parent=0 // pred_region
    _
  $region21: #{tpu_custom_call.1} parent=0 // pred_fallthru
    _
  // Predicated region
  $region22: #{tpu_custom_call.1} parent=0 // pred_check
    _
  $region23: #{tpu_custom_call.1} parent=0 // pred_check_branch
    %25 = sbr.rel (0) target = $region25
  $region24: #{tpu_custom_call.1} parent=0 // pred_region
    _
  $region25: #{tpu_custom_call.1} parent=0 // pred_fallthru
    _
  // Predicated region
  $region26: #{tpu_custom_call.1} parent=0 // pred_check
    _
  $region27: #{tpu_custom_call.1} parent=0 // pred_check_branch
    %27 = sbr.rel (0) target = $region29
  $region28: #{tpu_custom_call.1} parent=0 // pred_region
    _
  $region29: #{tpu_custom_call.1} parent=0 // pred_fallthru
    _
  %v29 = vld [vmem:[%s0] sm:$0xf]
  %v30 = vld [vmem:[%s1] sm:$0xf]
  %v31 = vld [vmem:[%s1 + $0x4] sm:$0xf]
  %v32 = vld [vmem:[%s2] sm:$0x1]
  %v34 = vperm.slane %v32, 0
  %v38 = vunpack.c.l.b16 %v30
  %v39 = vunpack.c.l.b16 %v31
  %v40 = vpack.c.b16 %v39, %v38
  %vm42 = vcmask 130048
  %v44 = vsel %vm42, %v29, 0
  %46 = vmatpush.bf16.msra.mxu0 0
  %47 = vmatpush.bf16.msra.mxu0 0
  %48 = vmatpush.bf16.msra.mxu0 0
  %49 = vmatpush.bf16.msra.mxu0 0
  %50 = vmatpush.bf16.msra.mxu0 0
  %51 = vmatpush.bf16.msra.mxu0 0
  %52 = vmatpush.bf16.msra.mxu0 0
  %53 = vmatpush.bf16.msra.mxu0 %v40
  %54 = vmatmul.bf16.gmra.mxu0 %v44
  %v55 = vpop.f32.mrf.mxu0
  %v56 = vadd.f32 %v34, %v55
  %v57 = vpop.f32.mrf.mxu0
  %58 = vdwg.mxu0
  %v59 = vmax.f32 %v56, 0.0
  %v60 = vpack.c.bf16 %v59, %v59
  %v61 = vld [vmem:[%s3] sm:$0xf]
  %v62 = vld [vmem:[%s3 + $0x4] sm:$0xf]
  %v63 = vld [vmem:[%s3 + $0x8] sm:$0xf]
  %v64 = vld [vmem:[%s3 + $0xc] sm:$0xf]
  %v65 = vld [vmem:[%s3 + $0x10] sm:$0xf]
  %v66 = vld [vmem:[%s3 + $0x14] sm:$0xf]
  %v67 = vld [vmem:[%s3 + $0x18] sm:$0xf]
  %v68 = vld [vmem:[%s3 + $0x1c] sm:$0xf]
  %v69 = vld [vmem:[%s4] sm:$0x1]
  %v71 = vperm.slane %v69, 0
  %v81 = vunpack.c.l.b16 %v61
  %v82 = vunpack.c.l.b16 %v62
  %v83 = vunpack.c.l.b16 %v63
  %v84 = vunpack.c.l.b16 %v64
  %v85 = vunpack.c.l.b16 %v65
  %v86 = vunpack.c.l.b16 %v66
  %v87 = vunpack.c.l.b16 %v67
  %v88 = vunpack.c.l.b16 %v68
  %v89 = vpack.c.b16 %v82, %v81
  %v90 = vpack.c.b16 %v84, %v83
  %v91 = vpack.c.b16 %v86, %v85
  %v92 = vpack.c.b16 %v88, %v87
  %vm97 = vcmask 523264
  %v99 = vsel %vm97, %v60, 0
  %101 = vmatpush.bf16.msra.mxu0 0
  %102 = vmatpush.bf16.msra.mxu0 0
  %103 = vmatpush.bf16.msra.mxu0 0
  %104 = vmatpush.bf16.msra.mxu0 0
  %105 = vmatpush.bf16.msra.mxu0 %v92
  %106 = vmatpush.bf16.msra.mxu0 %v91
  %107 = vmatpush.bf16.msra.mxu0 %v90
  %108 = vmatpush.bf16.msra.mxu0 %v89
  %109 = vmatmul.bf16.gmra.mxu0 %v99
  %v110 = vpop.f32.mrf.mxu0
  %v111 = vadd.f32 %v71, %v110
  %v112 = vpop.f32.mrf.mxu0
  %113 = vdwg.mxu0
  %v114 = vmax.f32 %v111, 0.0
  %v115 = vpack.c.bf16 %v114, %v114
  %v116 = vld [vmem:[%s5] sm:$0xf]
  %v117 = vld [vmem:[%s5 + $0x4] sm:$0xf]
  %v118 = vld [vmem:[%s5 + $0x8] sm:$0xf]
  %v119 = vld [vmem:[%s5 + $0xc] sm:$0xf]
  %v120 = vld [vmem:[#allocation2] sm:$0x1]
  %v122 = vperm.slane %v120, 0
  %v128 = vunpack.c.l.b16 %v116
  %v129 = vunpack.c.l.b16 %v117
  %v130 = vunpack.c.l.b16 %v118
  %v131 = vunpack.c.l.b16 %v119
  %v132 = vpack.c.b16 %v129, %v128
  %v133 = vpack.c.b16 %v131, %v130
  %vm136 = vcmask 261120
  %v138 = vsel %vm136, %v115, 0
  %140 = vmatpush.bf16.msra.mxu0 0
  %141 = vmatpush.bf16.msra.mxu0 0
  %142 = vmatpush.bf16.msra.mxu0 0
  %143 = vmatpush.bf16.msra.mxu0 0
  %144 = vmatpush.bf16.msra.mxu0 0
  %145 = vmatpush.bf16.msra.mxu0 0
  %146 = vmatpush.bf16.msra.mxu0 %v133
  %147 = vmatpush.bf16.msra.mxu0 %v132
  %148 = vmatmul.bf16.gmra.mxu0 %v138
  %v149 = vpop.f32.mrf.mxu0
  %v150 = vadd.f32 %v122, %v149
  %v151 = vpop.f32.mrf.mxu0
  %152 = vdwg.mxu0
  %vm153 = vcmask 7168
  %154 = vst.msk [vmem:[%s7] sm:$0xff] %vm153, %v150
  // Predicated region
  $region30: #{tpu_custom_call.1} parent=0 // pred_check
    _
  $region31: #{tpu_custom_call.1} parent=0 // pred_check_branch
    %156 = sbr.rel (0) target = $region33
  $region32: #{tpu_custom_call.1} parent=0 // pred_region
    _
  $region33: #{tpu_custom_call.1} parent=0 // pred_fallthru
    _
  // Predicated region
  $region34: #{tpu_custom_call.1} parent=0 // pred_check
    _
  $region35: #{tpu_custom_call.1} parent=0 // pred_check_branch
    %158 = sbr.rel (0) target = $region37
  $region36: #{tpu_custom_call.1} parent=0 // pred_region
    _
  $region37: #{tpu_custom_call.1} parent=0 // pred_fallthru
    _

</llo_original>
